<compile_context>
chip_gen: v7x
topology: tpu7x:2x2x1
jax: 0.10.0
libtpu: 0.0.40
codegen_flags: <defaults>
</compile_context>

<pallas_src>
import jax
import jax.numpy as jnp
from jax.experimental import pallas as pl
from jax.experimental.pallas import tpu as pltpu


def _round_up(x, m):
    return (x + m - 1) // m * m


def gru_kernel(xh_ref, h_ref, wg_ref, wch_ref, bg_ref, out_ref):
    """One batch block of the GRU cell.

    xh_ref : [bb, Kp]      (compute dtype)  -- [x | h | 0-pad] on the lane axis
    h_ref  : [bb, Hp]      (f32)            -- hidden state alone
    wg_ref : [Kp, 3*Hp]    (compute dtype)  -- [Wr^T | Wu^T | Wcx^T(+0 rows for h)]
    wch_ref: [Hp, Hp]      (compute dtype)  -- candidate weight for (reset*h)
    bg_ref : [1, 3*Hp]     (f32)            -- [br | bu | bc]
    out_ref: [bb, Hp]      (f32)
    """
    hp = out_ref.shape[-1]
    h = h_ref[...]                                            # f32

    # Single wide MXU matmul for all three gate linears (x contribution).
    gates = (jnp.dot(xh_ref[...], wg_ref[...],
                     preferred_element_type=jnp.float32)
             + bg_ref[...])                                   # [bb, 3*Hp] f32

    reset = jax.nn.sigmoid(gates[:, :hp])
    update = jax.nn.sigmoid(gates[:, hp:2 * hp])
    cand_x = gates[:, 2 * hp:]                                # x@Wcx + bc

    # Candidate: add the (reset * h) contribution with a second matmul.
    rh = (reset * h).astype(wch_ref.dtype)
    cand = jnp.tanh(cand_x + jnp.dot(rh, wch_ref[...],
                                     preferred_element_type=jnp.float32))

    # output = (1 - update) * h + update * candidate  ==  h + update*(cand - h)
    out_ref[...] = h + update * (cand - h)


def gru_forward(x, h, params, compute_dtype=jnp.bfloat16):
    """GRU cell forward.

    params: dict with Wr, br, Wu, bu, Wc, bc where W* is [H, I+H] (PyTorch
    nn.Linear layout, [out_features, in_features]) and b* is [H].
    compute_dtype: dtype of the matmul operands (bf16 for v6e/v7x MXU sweet
    spot, f32 for exactness); accumulation is always f32.
    """
    B, I = x.shape
    H = h.shape[1]
    K = I + H

    Hp = _round_up(H, 128)            # lane-dense hidden width
    Kp = _round_up(K, 128)            # lane-dense contraction width
    bb = min(_round_up(B, 8), 256)    # batch block (multiple of 8)
    Bp = _round_up(B, bb)

    f32 = jnp.float32

    def pad2(a, rows, cols):
        a = a.astype(f32)
        return jnp.pad(a, ((0, rows - a.shape[0]), (0, cols - a.shape[1])))

    # --- fused gate weight: [Kp, 3*Hp] = [Wr^T | Wu^T | Wcx^T (h-rows zeroed)]
    wr_t = params["Wr"].T                       # [K, H]
    wu_t = params["Wu"].T                       # [K, H]
    wc_t = params["Wc"].T                       # [K, H]
    wcx_only = jnp.concatenate(
        [wc_t[:I, :], jnp.zeros((H, H), f32)], axis=0)       # h must NOT feed this block
    w_gates = jnp.concatenate(
        [pad2(wr_t, Kp, Hp), pad2(wu_t, Kp, Hp), pad2(wcx_only, Kp, Hp)],
        axis=1).astype(compute_dtype)                         # [Kp, 3*Hp]

    # --- candidate weight for (reset * h): [Hp, Hp]
    w_ch = pad2(wc_t[I:, :], Hp, Hp).astype(compute_dtype)

    # --- fused biases: [1, 3*Hp] (kept f32)
    def pad1(b):
        return jnp.pad(b.astype(f32), (0, Hp - H))
    b_gates = jnp.concatenate(
        [pad1(params["br"]), pad1(params["bu"]), pad1(params["bc"])]
    ).reshape(1, 3 * Hp)

    # --- activations
    xh = jnp.concatenate([x, h], axis=1).astype(f32)          # [B, K]
    xh = jnp.pad(xh, ((0, Bp - B), (0, Kp - K))).astype(compute_dtype)
    h_pad = jnp.pad(h.astype(f32), ((0, Bp - B), (0, Hp - H)))

    grid = (Bp // bb,)
    out = pl.pallas_call(
        gru_kernel,
        out_shape=jax.ShapeDtypeStruct((Bp, Hp), f32),
        grid=grid,
        in_specs=[
            pl.BlockSpec((bb, Kp), lambda i: (i, 0)),         # xh (per batch block)
            pl.BlockSpec((bb, Hp), lambda i: (i, 0)),         # h  (per batch block)
            pl.BlockSpec((Kp, 3 * Hp), lambda i: (0, 0)),     # fused gate weights
            pl.BlockSpec((Hp, Hp), lambda i: (0, 0)),         # candidate-h weights
            pl.BlockSpec((1, 3 * Hp), lambda i: (0, 0)),      # fused biases
        ],
        out_specs=pl.BlockSpec((bb, Hp), lambda i: (i, 0)),
        compiler_params=pltpu.CompilerParams(
            dimension_semantics=("parallel",)),
    )(xh, h_pad, w_gates, w_ch, b_gates)

    return out[:B, :H]


def init_params(key, input_size, hidden_size):
    """Deterministic init mimicking nn.Linear's U(-1/sqrt(fan_in), 1/sqrt(fan_in))."""
    fan_in = input_size + hidden_size
    k = 1.0 / jnp.sqrt(fan_in)
    keys = jax.random.split(key, 6)
    u = lambda kk, shape: jax.random.uniform(kk, shape, jnp.float32, -k, k)
    return {
        "Wr": u(keys[0], (hidden_size, fan_in)), "br": u(keys[1], (hidden_size,)),
        "Wu": u(keys[2], (hidden_size, fan_in)), "bu": u(keys[3], (hidden_size,)),
        "Wc": u(keys[4], (hidden_size, fan_in)), "bc": u(keys[5], (hidden_size,)),
    }


def gru_reference(x, h, params):
    """Pure-JAX reference matching the PyTorch forward exactly."""
    combined = jnp.concatenate([x, h], axis=1)
    reset = jax.nn.sigmoid(combined @ params["Wr"].T + params["br"])
    update = jax.nn.sigmoid(combined @ params["Wu"].T + params["bu"])
    combined2 = jnp.concatenate([x, reset * h], axis=1)
    candidate = jnp.tanh(combined2 @ params["Wc"].T + params["bc"])
    return (1.0 - update) * h + update * candidate


if __name__ == "__main__":
    batch_size = 32
    input_size = 10
    hidden_size = 20

    key = jax.random.PRNGKey(0)
    k_x, k_p = jax.random.split(key)
    x = jax.random.normal(k_x, (batch_size, input_size), dtype=jnp.float32)
    hidden = jnp.zeros((batch_size, hidden_size), dtype=jnp.float32)
    params = init_params(k_p, input_size, hidden_size)

    ref = gru_reference(x, hidden, params)

    # f32 matmul path: tight tolerance.
    out_f32 = jax.block_until_ready(
        gru_forward(x, hidden, params, compute_dtype=jnp.float32))
    assert out_f32.shape == (batch_size, hidden_size)
    assert jnp.allclose(out_f32, ref, atol=1e-5, rtol=1e-5), "f32 mismatch vs reference"

    # bf16 matmul path (default, v6e/v7x MXU): loosened tolerance.
    out_bf16 = jax.block_until_ready(gru_forward(x, hidden, params))
    assert out_bf16.shape == (batch_size, hidden_size)
    assert jnp.allclose(out_bf16, ref, atol=3e-2, rtol=3e-2), "bf16 mismatch vs reference"

    print("KERNEL_OK")
</pallas_src>

<mosaic_0001>
module attributes {stable_mosaic.version = 11 : i64} {
  func.func @gru_kernel(%arg0: i32, %arg1: memref<32x128xf32, #tpu.memory_space<vmem>>, %arg2: memref<32x128xf32, #tpu.memory_space<vmem>>, %arg3: memref<128x384xf32, #tpu.memory_space<vmem>>, %arg4: memref<128x128xf32, #tpu.memory_space<vmem>>, %arg5: memref<1x384xf32, #tpu.memory_space<vmem>>, %arg6: memref<32x128xf32, #tpu.memory_space<vmem>>) attributes {dimension_semantics = [#tpu.dimension_semantics<parallel>], iteration_bounds = array<i64: 1>, scalar_prefetch = 0 : i64, scratch_operands = 0 : i64, tpu.core_type = #tpu.core_type<tc>, window_params = [{transform_indices = @transform_0, window_bounds = array<i64: 32, 128>}, {transform_indices = @transform_1, window_bounds = array<i64: 32, 128>}, {pipeline_mode = #tpu.pipeline_mode<synchronous>, transform_indices = @transform_2, window_bounds = array<i64: 128, 384>}, {pipeline_mode = #tpu.pipeline_mode<synchronous>, transform_indices = @transform_3, window_bounds = array<i64: 128, 128>}, {pipeline_mode = #tpu.pipeline_mode<synchronous>, transform_indices = @transform_4, window_bounds = array<i64: 1, 384>}, {transform_indices = @transform_5, window_bounds = array<i64: 32, 128>}]} {
    %c0 = arith.constant 0 : index
    %c0_0 = arith.constant 0 : index
    %0 = vector.load %arg2[%c0, %c0_0] : memref<32x128xf32, #tpu.memory_space<vmem>>, vector<32x128xf32>
    %c0_1 = arith.constant 0 : index
    %c0_2 = arith.constant 0 : index
    %1 = vector.load %arg1[%c0_1, %c0_2] : memref<32x128xf32, #tpu.memory_space<vmem>>, vector<32x128xf32>
    %c0_3 = arith.constant 0 : index
    %c0_4 = arith.constant 0 : index
    %2 = vector.load %arg3[%c0_3, %c0_4] : memref<128x384xf32, #tpu.memory_space<vmem>>, vector<128x384xf32>
    %cst = arith.constant dense<0.000000e+00> : vector<32x384xf32>
    %3 = tpu.matmul %1, %2, %cst {dimension_numbers = #tpu.dot_dimension_numbers<[1], [0], [0], [1], [0, 0, 1, 1], [], []>} : vector<32x128xf32>, vector<128x384xf32>, vector<32x384xf32> -> vector<32x384xf32>
    %c0_5 = arith.constant 0 : index
    %c0_6 = arith.constant 0 : index
    %4 = vector.load %arg5[%c0_5, %c0_6] : memref<1x384xf32, #tpu.memory_space<vmem>>, vector<1x384xf32>
    %5 = vector.broadcast %4 : vector<1x384xf32> to vector<32x384xf32>
    %6 = arith.addf %3, %5 : vector<32x384xf32>
    %7 = vector.extract_strided_slice %6 {offsets = [0, 0], sizes = [32, 128], strides = [1, 1]} : vector<32x384xf32> to vector<32x128xf32>
    %8 = arith.negf %7 : vector<32x128xf32>
    %9 = math.exp %8 : vector<32x128xf32>
    %cst_7 = arith.constant 1.000000e+00 : f32
    %10 = vector.broadcast %cst_7 : f32 to vector<32x128xf32>
    %11 = arith.addf %10, %9 : vector<32x128xf32>
    %12 = arith.divf %10, %11 : vector<32x128xf32>
    %13 = vector.extract_strided_slice %6 {offsets = [0, 128], sizes = [32, 128], strides = [1, 1]} : vector<32x384xf32> to vector<32x128xf32>
    %14 = arith.negf %13 : vector<32x128xf32>
    %15 = math.exp %14 : vector<32x128xf32>
    %cst_8 = arith.constant 1.000000e+00 : f32
    %16 = vector.broadcast %cst_8 : f32 to vector<32x128xf32>
    %17 = arith.addf %16, %15 : vector<32x128xf32>
    %18 = arith.divf %16, %17 : vector<32x128xf32>
    %19 = vector.extract_strided_slice %6 {offsets = [0, 256], sizes = [32, 128], strides = [1, 1]} : vector<32x384xf32> to vector<32x128xf32>
    %20 = arith.mulf %12, %0 : vector<32x128xf32>
    %c0_9 = arith.constant 0 : index
    %c0_10 = arith.constant 0 : index
    %21 = vector.load %arg4[%c0_9, %c0_10] : memref<128x128xf32, #tpu.memory_space<vmem>>, vector<128x128xf32>
    %cst_11 = arith.constant dense<0.000000e+00> : vector<32x128xf32>
    %22 = tpu.matmul %20, %21, %cst_11 {dimension_numbers = #tpu.dot_dimension_numbers<[1], [0], [0], [1], [0, 0, 1, 1], [], []>} : vector<32x128xf32>, vector<128x128xf32>, vector<32x128xf32> -> vector<32x128xf32>
    %23 = arith.addf %19, %22 : vector<32x128xf32>
    %24 = math.tanh %23 : vector<32x128xf32>
    %25 = arith.subf %24, %0 : vector<32x128xf32>
    %26 = arith.mulf %18, %25 : vector<32x128xf32>
    %27 = arith.addf %0, %26 : vector<32x128xf32>
    %c0_12 = arith.constant 0 : index
    %c0_13 = arith.constant 0 : index
    %28 = vector.load %arg6[%c0_12, %c0_13] : memref<32x128xf32, #tpu.memory_space<vmem>>, vector<32x128xf32>
    tpu.vector_store %arg6[%c0_12, %c0_13], %27 {strides = array<i32>} : memref<32x128xf32, #tpu.memory_space<vmem>>, vector<32x128xf32>,
    return
  }
  func.func @transform_0(%arg0: i32) -> (i32, i32) {
    %c0_i32 = arith.constant 0 : i32
    %c0_i32_0 = arith.constant 0 : i32
    return %arg0, %c0_i32 : i32, i32
  }
  func.func @transform_1(%arg0: i32) -> (i32, i32) {
    %c0_i32 = arith.constant 0 : i32
    %c0_i32_0 = arith.constant 0 : i32
    return %arg0, %c0_i32 : i32, i32
  }
  func.func @transform_2(%arg0: i32) -> (i32, i32) {
    %c0_i32 = arith.constant 0 : i32
    %c0_i32_0 = arith.constant 0 : i32
    %c0_i32_1 = arith.constant 0 : i32
    return %c0_i32, %c0_i32_0 : i32, i32
  }
  func.func @transform_3(%arg0: i32) -> (i32, i32) {
    %c0_i32 = arith.constant 0 : i32
    %c0_i32_0 = arith.constant 0 : i32
    %c0_i32_1 = arith.constant 0 : i32
    return %c0_i32, %c0_i32_0 : i32, i32
  }
  func.func @transform_4(%arg0: i32) -> (i32, i32) {
    %c0_i32 = arith.constant 0 : i32
    %c0_i32_0 = arith.constant 0 : i32
    %c0_i32_1 = arith.constant 0 : i32
    return %c0_i32, %c0_i32_0 : i32, i32
  }
  func.func @transform_5(%arg0: i32) -> (i32, i32) {
    %c0_i32 = arith.constant 0 : i32
    %c0_i32_0 = arith.constant 0 : i32
    return %arg0, %c0_i32 : i32, i32
  }
}

</mosaic_0001>

<llo_original>
// kernel: tpu_custom_call.1
$region0: #{tpu_custom_call.1}
  #allocation0 [shape = 'u32[]', space=smem, size = 0x4, offset = 0x4, fixed_abs, tag = 'smem constant byte address 0x4 - core index']
  #allocation1 [shape = 'u32[144,128]{1,0:T(1,128)}', space=vmem, size = 0x12000, scoped, tag = 'internal scratch']
  %s0 = inlined_call_operand.hbm [shape: f32[32,128], index: 0, kind: input, shape index: {}]
  %s1 = inlined_call_operand.hbm [shape: f32[32,128], index: 1, kind: input, shape index: {}]
  %s2 = inlined_call_operand.hbm [shape: f32[128,384], index: 2, kind: input, shape index: {}]
  %s3 = inlined_call_operand.hbm [shape: f32[128,128], index: 3, kind: input, shape index: {}]
  %s4 = inlined_call_operand.vmem [shape: f32[1,384], index: 4, kind: input, shape index: {}]
  %s5 = inlined_call_operand.hbm [shape: f32[32,128], index: 5, kind: output, shape index: {}]
  %s6 = sld [smem:[#allocation0]]
  $region46: #{tpu_custom_call.1} parent=0
    _
  %s8 = ssub.s32 1, %s6
  %s9 = scalar_select 0, %s8, %s6
  $region1: #{tpu_custom_call.1} parent=0
    #allocation2 [shape = 'u8[16384]{0}', space=vmem, size = 0x4000, scoped, tag = 'input window, operand 0, single buffered']
    #allocation3 [shape = 's32[1]{0}', space=sflag, size = 0x4, scoped, tag = 'scoped memory for tpu_custom_call.1']
    #allocation4 [shape = 's32[1]{0}', space=sflag, size = 0x4, scoped, tag = 'scoped memory for tpu_custom_call.1']
    #allocation5 [shape = 'u8[16384]{0}', space=vmem, size = 0x4000, scoped, tag = 'input window, operand 1, single buffered']
    #allocation6 [shape = 's32[1]{0}', space=sflag, size = 0x4, scoped, tag = 'scoped memory for tpu_custom_call.1']
    #allocation7 [shape = 'u8[196608]{0}', space=vmem, size = 0x30000, scoped, tag = 'input window, operand 2, single buffered']
    #allocation8 [shape = 'u8[65536]{0}', space=vmem, size = 0x10000, scoped, tag = 'input window, operand 3, single buffered']
    #allocation9 [shape = 's32[1]{0}', space=sflag, size = 0x4, scoped, tag = 'scoped memory for tpu_custom_call.1']
    #allocation10 [shape = 'u8[16384]{0}', space=vmem, size = 0x4000, scoped, tag = 'output window, operand 0, single buffered']
    %10 = vsyncpa [#allocation3], 0
    %11 = vsyncpa [#allocation6], 0
    %12 = vsyncpa [#allocation9], 0
    %13 = vsyncpa [#allocation4], 0
    // Predicated region
    $region2: #{tpu_custom_call.1} parent=1 // pred_check
      _
    $region3: #{tpu_custom_call.1} parent=1 // pred_check_branch
      %15 = sbr.rel (0) target = $region5
    $region4: #{tpu_custom_call.1} parent=1 // pred_region
      %s17 = ssub.s32 512, 512
      %18 = vsyncadd [#allocation3], %s17
      %s19 = sshll.u32 [#allocation2], 4
      %s20 = int_to_ptr.vmem [resolvable:$true] %s19
      %25 = dma.hbm_to_vmem [thread:$0]  %s0, 512, %s20, [#allocation3], 128, 128, 8
    $region5: #{tpu_custom_call.1} parent=1 // pred_fallthru
      _
    // Predicated region
    $region6: #{tpu_custom_call.1} parent=1 // pred_check
      _
    $region7: #{tpu_custom_call.1} parent=1 // pred_check_branch
      %27 = sbr.rel (0) target = $region9
    $region8: #{tpu_custom_call.1} parent=1 // pred_region
      %s29 = ssub.s32 512, 512
      %30 = vsyncadd [#allocation6], %s29
      %s31 = sshll.u32 [#allocation5], 4
      %s32 = int_to_ptr.vmem [resolvable:$true] %s31
      %37 = dma.hbm_to_vmem [thread:$0]  %s1, 512, %s32, [#allocation6], 128, 128, 8
    $region9: #{tpu_custom_call.1} parent=1 // pred_fallthru
      _
    // Predicated region
    $region10: #{tpu_custom_call.1} parent=1 // pred_check
      _
    $region11: #{tpu_custom_call.1} parent=1 // pred_check_branch
      %39 = sbr.rel (0) target = $region13
    $region12: #{tpu_custom_call.1} parent=1 // pred_region
      %s41 = ssub.s32 6144, 6144
      %42 = vsyncadd [#allocation6], %s41
      %s43 = sshll.u32 [#allocation7], 4
      %s44 = int_to_ptr.vmem [resolvable:$true] %s43
      %49 = dma.hbm_to_vmem [thread:$0]  %s2, 6144, %s44, [#allocation6], 384, 384, 24
    $region13: #{tpu_custom_call.1} parent=1 // pred_fallthru
      _
    // Predicated region
    $region14: #{tpu_custom_call.1} parent=1 // pred_check
      _
    $region15: #{tpu_custom_call.1} parent=1 // pred_check_branch
      %51 = sbr.rel (0) target = $region17
    $region16: #{tpu_custom_call.1} parent=1 // pred_region
      %s53 = ssub.s32 2048, 2048
      %54 = vsyncadd [#allocation9], %s53
      %s55 = sshll.u32 [#allocation8], 4
      %s56 = int_to_ptr.vmem [resolvable:$true] %s55
      %61 = dma.hbm_to_vmem [thread:$0]  %s3, 2048, %s56, [#allocation9], 128, 128, 8
    $region17: #{tpu_custom_call.1} parent=1 // pred_fallthru
      _
    // Predicated region
    $region18: #{tpu_custom_call.1} parent=1 // pred_check
      _
    $region19: #{tpu_custom_call.1} parent=1 // pred_check_branch
      %63 = sbr.rel (0) target = $region21
    $region20: #{tpu_custom_call.1} parent=1 // pred_region
      _
    $region21: #{tpu_custom_call.1} parent=1 // pred_fallthru
      _
    // Predicated region
    $region22: #{tpu_custom_call.1} parent=1 // pred_check
      _
    $region23: #{tpu_custom_call.1} parent=1 // pred_check_branch
      %65 = sbr.rel (0) target = $region25
    $region24: #{tpu_custom_call.1} parent=1 // pred_region
      %66 = dma.done [#allocation3], 512
    $region25: #{tpu_custom_call.1} parent=1 // pred_fallthru
      _
    // Predicated region
    $region26: #{tpu_custom_call.1} parent=1 // pred_check
      _
    $region27: #{tpu_custom_call.1} parent=1 // pred_check_branch
      %68 = sbr.rel (0) target = $region29
    $region28: #{tpu_custom_call.1} parent=1 // pred_region
      %69 = dma.done [#allocation6], 512
    $region29: #{tpu_custom_call.1} parent=1 // pred_fallthru
      _
    // Predicated region
    $region30: #{tpu_custom_call.1} parent=1 // pred_check
      _
    $region31: #{tpu_custom_call.1} parent=1 // pred_check_branch
      %71 = sbr.rel (0) target = $region33
    $region32: #{tpu_custom_call.1} parent=1 // pred_region
      %72 = dma.done [#allocation6], 6144
    $region33: #{tpu_custom_call.1} parent=1 // pred_fallthru
      _
    // Predicated region
    $region34: #{tpu_custom_call.1} parent=1 // pred_check
      _
    $region35: #{tpu_custom_call.1} parent=1 // pred_check_branch
      %74 = sbr.rel (0) target = $region37
    $region36: #{tpu_custom_call.1} parent=1 // pred_region
      %75 = dma.done [#allocation9], 2048
    $region37: #{tpu_custom_call.1} parent=1 // pred_fallthru
      _
    %v76 = vld [vmem:[#allocation5] sm:$0xff]
    %v77 = vld [vmem:[#allocation5 + $0x8] sm:$0xff]
    %v78 = vld [vmem:[#allocation5 + $0x10] sm:$0xff]
    %v79 = vld [vmem:[#allocation5 + $0x18] sm:$0xff]
    %v80 = vld [vmem:[#allocation2] sm:$0xff]
    %v81 = vld [vmem:[#allocation2 + $0x8] sm:$0xff]
    %v82 = vld [vmem:[#allocation2 + $0x10] sm:$0xff]
    %v83 = vld [vmem:[#allocation2 + $0x18] sm:$0xff]
    %v84 = vld [vmem:[#allocation7] sm:$0xff]
    %v85 = vld [vmem:[#allocation7 + $0x8] sm:$0xff]
    %v86 = vld [vmem:[#allocation7 + $0x10] sm:$0xff]
    %v87 = vld [vmem:[#allocation7 + $0x18] sm:$0xff]
    %v88 = vld [vmem:[#allocation7 + $0x20] sm:$0xff]
    %v89 = vld [vmem:[#allocation7 + $0x28] sm:$0xff]
    %v90 = vld [vmem:[#allocation7 + $0x30] sm:$0xff]
    %v91 = vld [vmem:[#allocation7 + $0x38] sm:$0xff]
    %v92 = vld [vmem:[#allocation7 + $0x40] sm:$0xff]
    %v93 = vld [vmem:[#allocation7 + $0x48] sm:$0xff]
    %v94 = vld [vmem:[#allocation7 + $0x50] sm:$0xff]
    %v95 = vld [vmem:[#allocation7 + $0x58] sm:$0xff]
    %v96 = vld [vmem:[#allocation7 + $0x60] sm:$0xff]
    %v97 = vld [vmem:[#allocation7 + $0x68] sm:$0xff]
    %v98 = vld [vmem:[#allocation7 + $0x70] sm:$0xff]
    %v99 = vld [vmem:[#allocation7 + $0x78] sm:$0xff]
    %v100 = vld [vmem:[#allocation7 + $0x80] sm:$0xff]
    %v101 = vld [vmem:[#allocation7 + $0x88] sm:$0xff]
    %v102 = vld [vmem:[#allocation7 + $0x90] sm:$0xff]
    %v103 = vld [vmem:[#allocation7 + $0x98] sm:$0xff]
    %v104 = vld [vmem:[#allocation7 + $0xa0] sm:$0xff]
    %v105 = vld [vmem:[#allocation7 + $0xa8] sm:$0xff]
    %v106 = vld [vmem:[#allocation7 + $0xb0] sm:$0xff]
    %v107 = vld [vmem:[#allocation7 + $0xb8] sm:$0xff]
    %v108 = vld [vmem:[#allocation7 + $0xc0] sm:$0xff]
    %v109 = vld [vmem:[#allocation7 + $0xc8] sm:$0xff]
    %v110 = vld [vmem:[#allocation7 + $0xd0] sm:$0xff]
    %v111 = vld [vmem:[#allocation7 + $0xd8] sm:$0xff]
    %v112 = vld [vmem:[#allocation7 + $0xe0] sm:$0xff]
    %v113 = vld [vmem:[#allocation7 + $0xe8] sm:$0xff]
    %v114 = vld [vmem:[#allocation7 + $0xf0] sm:$0xff]
    %v115 = vld [vmem:[#allocation7 + $0xf8] sm:$0xff]
    %v116 = vld [vmem:[#allocation7 + $0x100] sm:$0xff]
    %v117 = vld [vmem:[#allocation7 + $0x108] sm:$0xff]
    %v118 = vld [vmem:[#allocation7 + $0x110] sm:$0xff]
    %v119 = vld [vmem:[#allocation7 + $0x118] sm:$0xff]
    %v120 = vld [vmem:[#allocation7 + $0x120] sm:$0xff]
    %v121 = vld [vmem:[#allocation7 + $0x128] sm:$0xff]
    %v122 = vld [vmem:[#allocation7 + $0x130] sm:$0xff]
    %v123 = vld [vmem:[#allocation7 + $0x138] sm:$0xff]
    %v124 = vld [vmem:[#allocation7 + $0x140] sm:$0xff]
    %v125 = vld [vmem:[#allocation7 + $0x148] sm:$0xff]
    %v126 = vld [vmem:[#allocation7 + $0x150] sm:$0xff]
    %v127 = vld [vmem:[#allocation7 + $0x158] sm:$0xff]
    %v128 = vld [vmem:[#allocation7 + $0x160] sm:$0xff]
    %v129 = vld [vmem:[#allocation7 + $0x168] sm:$0xff]
    %v130 = vld [vmem:[#allocation7 + $0x170] sm:$0xff]
    %v131 = vld [vmem:[#allocation7 + $0x178] sm:$0xff]
    %v132 = vld [vmem:[%s4] sm:$0x7]
    %v134 = vlaneseq
    %v135 = vshrl.u32 %v134, 7
    %v136 = vsub.s32 0, %v135
    %v137 = vrot.slane %v132, %v136
    %v138 = vlaneseq
    %v139 = vshrl.u32 %v138, 7
    %v140 = vsub.s32 1, %v139
    %v141 = vrot.slane %v132, %v140
    %v142 = vlaneseq
    %v143 = vshrl.u32 %v142, 7
    %v144 = vsub.s32 2, %v143
    %v145 = vrot.slane %v132, %v144
    %149 = vmatprep.subr.mxu0 %v85
    %150 = vmatpush1.msra.mxu0 %v84
    %151 = vmatprep.subr.mxu0 %v88
    %152 = vmatpush1.msra.mxu0 %v87
    %153 = vmatprep.subr.mxu0 %v91
    %154 = vmatpush1.msra.mxu0 %v90
    %155 = vmatprep.subr.mxu0 %v94
    %156 = vmatpush1.msra.mxu0 %v93
    %157 = vmatprep.subr.mxu0 %v97
    %158 = vmatpush1.msra.mxu0 %v96
    %159 = vmatprep.subr.mxu0 %v100
    %160 = vmatpush1.msra.mxu0 %v99
    %161 = vmatprep.subr.mxu0 %v103
    %162 = vmatpush1.msra.mxu0 %v102
    %163 = vmatprep.subr.mxu0 %v106
    %164 = vmatpush1.msra.mxu0 %v105
    %165 = vmatprep.subr.mxu0 %v109
    %166 = vmatpush1.msra.mxu0 %v108
    %167 = vmatprep.subr.mxu0 %v112
    %168 = vmatpush1.msra.mxu0 %v111
    %169 = vmatprep.subr.mxu0 %v115
    %170 = vmatpush1.msra.mxu0 %v114
    %171 = vmatprep.subr.mxu0 %v118
    %172 = vmatpush1.msra.mxu0 %v117
    %173 = vmatprep.subr.mxu0 %v121
    %174 = vmatpush1.msra.mxu0 %v120
    %175 = vmatprep.subr.mxu0 %v124
    %176 = vmatpush1.msra.mxu0 %v123
    %177 = vmatprep.subr.mxu0 %v127
    %178 = vmatpush1.msra.mxu0 %v126
    %179 = vmatprep.subr.mxu0 %v130
    %180 = vmatpush1.msra.mxu0 %v129
    %181 = vmatprep.subr.mxu0 0.0
    %182 = vmatpush1.msra.mxu0 0.0
    %183 = vmatprep.subr.mxu0 0.0
    %184 = vmatpush1.msra.mxu0 0.0
    %185 = vmatprep.subr.mxu0 0.0
    %186 = vmatpush1.msra.mxu0 0.0
    %187 = vmatprep.subr.mxu0 0.0
    %188 = vmatpush1.msra.mxu0 0.0
    %189 = vmatprep.subr.mxu0 0.0
    %190 = vmatpush1.msra.mxu0 0.0
    %191 = vmatprep.subr.mxu0 0.0
    %192 = vmatpush1.msra.mxu0 0.0
    %193 = vmatprep.subr.mxu0 0.0
    %194 = vmatpush1.msra.mxu0 0.0
    %195 = vmatprep.subr.mxu0 0.0
    %196 = vmatpush1.msra.mxu0 0.0
    %197 = vmatprep.subr.mxu0 0.0
    %198 = vmatpush1.msra.mxu0 0.0
    %199 = vmatprep.subr.mxu0 0.0
    %200 = vmatpush1.msra.mxu0 0.0
    %201 = vmatprep.subr.mxu0 0.0
    %202 = vmatpush1.msra.mxu0 0.0
    %203 = vmatprep.subr.mxu0 0.0
    %204 = vmatpush1.msra.mxu0 0.0
    %205 = vmatprep.subr.mxu0 0.0
    %206 = vmatpush1.msra.mxu0 0.0
    %207 = vmatprep.subr.mxu0 0.0
    %208 = vmatpush1.msra.mxu0 0.0
    %209 = vmatprep.subr.mxu0 0.0
    %210 = vmatpush1.msra.mxu0 0.0
    %211 = vmatprep.subr.mxu0 0.0
    %212 = vmatpush1.msra.mxu0 0.0
    %213 = vmatprep.mubr.f32.mxu0 0.0
    %214 = vmatmul.mubr.f32.gmra.mrb[0].mxu0 %v80
    %v215 = vpop.f32.mrb[0].mxu0
    %v216 = vadd.f32 %v137, %v215
    %v217 = vpop.f32.mrb[0].mxu0
    %v218 = vadd.f32 %v141, %v217
    %219 = vmatprep.mubr.f32.mxu0 0.0
    %220 = vmatmul.mubr.f32.gmra.mrb[0].mxu0 %v81
    %v221 = vpop.f32.mrb[0].mxu0
    %v222 = vadd.f32 %v137, %v221
    %v223 = vpop.f32.mrb[0].mxu0
    %v224 = vadd.f32 %v141, %v223
    %225 = vmatprep.mubr.f32.mxu0 0.0
    %226 = vmatmul.mubr.f32.gmra.mrb[0].mxu0 %v82
    %v227 = vpop.f32.mrb[0].mxu0
    %v228 = vadd.f32 %v137, %v227
    %v229 = vpop.f32.mrb[0].mxu0
    %v230 = vadd.f32 %v141, %v229
    %231 = vmatprep.mubr.f32.mxu0 0.0
    %232 = vmatmul.mubr.f32.gmra.mrb[0].mxu0 %v83
    %v233 = vpop.f32.mrb[0].mxu0
    %v234 = vadd.f32 %v137, %v233
    %v235 = vpop.f32.mrb[0].mxu0
    %v236 = vadd.f32 %v141, %v235
    %237 = vdwg.mxu0
    %238 = vmatprep.subr.mxu0 0.0
    %239 = vmatpush1.msra.mxu0 %v86
    %240 = vmatprep.subr.mxu0 0.0
    %241 = vmatpush1.msra.mxu0 %v89
    %242 = vmatprep.subr.mxu0 0.0
    %243 = vmatpush1.msra.mxu0 %v92
    %244 = vmatprep.subr.mxu0 0.0
    %245 = vmatpush1.msra.mxu0 %v95
    %246 = vmatprep.subr.mxu0 0.0
    %247 = vmatpush1.msra.mxu0 %v98
    %248 = vmatprep.subr.mxu0 0.0
    %249 = vmatpush1.msra.mxu0 %v101
    %250 = vmatprep.subr.mxu0 0.0
    %251 = vmatpush1.msra.mxu0 %v104
    %252 = vmatprep.subr.mxu0 0.0
    %253 = vmatpush1.msra.mxu0 %v107
    %254 = vmatprep.subr.mxu0 0.0
    %255 = vmatpush1.msra.mxu0 %v110
    %256 = vmatprep.subr.mxu0 0.0
    %257 = vmatpush1.msra.mxu0 %v113
    %258 = vmatprep.subr.mxu0 0.0
    %259 = vmatpush1.msra.mxu0 %v116
    %260 = vmatprep.subr.mxu0 0.0
    %261 = vmatpush1.msra.mxu0 %v119
    %262 = vmatprep.subr.mxu0 0.0
    %263 = vmatpush1.msra.mxu0 %v122
    %264 = vmatprep.subr.mxu0 0.0
    %265 = vmatpush1.msra.mxu0 %v125
    %266 = vmatprep.subr.mxu0 0.0
    %267 = vmatpush1.msra.mxu0 %v128
    %268 = vmatprep.subr.mxu0 0.0
    %269 = vmatpush1.msra.mxu0 %v131
    %270 = vmatprep.subr.mxu0 0.0
    %271 = vmatpush1.msra.mxu0 0.0
    %272 = vmatprep.subr.mxu0 0.0
    %273 = vmatpush1.msra.mxu0 0.0
    %274 = vmatprep.subr.mxu0 0.0
    %275 = vmatpush1.msra.mxu0 0.0
    %276 = vmatprep.subr.mxu0 0.0
    %277 = vmatpush1.msra.mxu0 0.0
    %278 = vmatprep.subr.mxu0 0.0
    %279 = vmatpush1.msra.mxu0 0.0
    %280 = vmatprep.subr.mxu0 0.0
    %281 = vmatpush1.msra.mxu0 0.0
    %282 = vmatprep.subr.mxu0 0.0
    %283 = vmatpush1.msra.mxu0 0.0
    %284 = vmatprep.subr.mxu0 0.0
    %285 = vmatpush1.msra.mxu0 0.0
    %286 = vmatprep.subr.mxu0 0.0
    %287 = vmatpush1.msra.mxu0 0.0
    %288 = vmatprep.subr.mxu0 0.0
    %289 = vmatpush1.msra.mxu0 0.0
    %290 = vmatprep.subr.mxu0 0.0
    %291 = vmatpush1.msra.mxu0 0.0
    %292 = vmatprep.subr.mxu0 0.0
    %293 = vmatpush1.msra.mxu0 0.0
    %294 = vmatprep.subr.mxu0 0.0
    %295 = vmatpush1.msra.mxu0 0.0
    %296 = vmatprep.subr.mxu0 0.0
    %297 = vmatpush1.msra.mxu0 0.0
    %298 = vmatprep.subr.mxu0 0.0
    %299 = vmatpush1.msra.mxu0 0.0
    %300 = vmatprep.subr.mxu0 0.0
    %301 = vmatpush1.msra.mxu0 0.0
    %302 = vmatprep.mubr.f32.mxu0 0.0
    %303 = vmatmul.mubr.f32.gmra.mrb[0].mxu0 %v80
    %v304 = vpop.f32.mrb[0].mxu0
    %v305 = vadd.f32 %v145, %v304
    %v306 = vpop.f32.mrb[0].mxu0
    %307 = vmatprep.mubr.f32.mxu0 0.0
    %308 = vmatmul.mubr.f32.gmra.mrb[0].mxu0 %v81
    %v309 = vpop.f32.mrb[0].mxu0
    %v310 = vadd.f32 %v145, %v309
    %v311 = vpop.f32.mrb[0].mxu0
    %312 = vmatprep.mubr.f32.mxu0 0.0
    %313 = vmatmul.mubr.f32.gmra.mrb[0].mxu0 %v82
    %v314 = vpop.f32.mrb[0].mxu0
    %v315 = vadd.f32 %v145, %v314
    %v316 = vpop.f32.mrb[0].mxu0
    %317 = vmatprep.mubr.f32.mxu0 0.0
    %318 = vmatmul.mubr.f32.gmra.mrb[0].mxu0 %v83
    %v319 = vpop.f32.mrb[0].mxu0
    %v320 = vadd.f32 %v145, %v319
    %v321 = vpop.f32.mrb[0].mxu0
    %322 = vdwg.mxu0
    %v323 = vxor.u32 %v216, 2147483648
    %v324 = vxor.u32 %v222, 2147483648
    %v325 = vxor.u32 %v228, 2147483648
    %v326 = vxor.u32 %v234, 2147483648
    %v327 = vmul.f32 %v323, 1.442695
    %v328 = vpow.pop %v327
    %v329 = vmul.f32 %v324, 1.442695
    %v330 = vpow.pop %v329
    %v331 = vmul.f32 %v325, 1.442695
    %v332 = vpow.pop %v331
    %v333 = vmul.f32 %v326, 1.442695
    %v334 = vpow.pop %v333
    %v335 = vadd.f32 %v328, 1.0
    %v336 = vadd.f32 %v330, 1.0
    %v337 = vadd.f32 %v332, 1.0
    %v338 = vadd.f32 %v334, 1.0
    %v339 = vrcp.pop %v335
    %v340 = vmul.f32 1.0, %v339
    %v341 = vrcp.pop %v336
    %v342 = vmul.f32 1.0, %v341
    %v343 = vrcp.pop %v337
    %v344 = vmul.f32 1.0, %v343
    %v345 = vrcp.pop %v338
    %v346 = vmul.f32 1.0, %v345
    %v347 = vxor.u32 %v218, 2147483648
    %v348 = vxor.u32 %v224, 2147483648
    %v349 = vxor.u32 %v230, 2147483648
    %v350 = vxor.u32 %v236, 2147483648
    %v351 = vmul.f32 %v347, 1.442695
    %v352 = vpow.pop %v351
    %v353 = vmul.f32 %v348, 1.442695
    %v354 = vpow.pop %v353
    %v355 = vmul.f32 %v349, 1.442695
    %v356 = vpow.pop %v355
    %v357 = vmul.f32 %v350, 1.442695
    %v358 = vpow.pop %v357
    %v359 = vadd.f32 %v352, 1.0
    %v360 = vadd.f32 %v354, 1.0
    %v361 = vadd.f32 %v356, 1.0
    %v362 = vadd.f32 %v358, 1.0
    %v363 = vrcp.pop %v359
    %v364 = vmul.f32 1.0, %v363
    %v365 = vrcp.pop %v360
    %v366 = vmul.f32 1.0, %v365
    %v367 = vrcp.pop %v361
    %v368 = vmul.f32 1.0, %v367
    %v369 = vrcp.pop %v362
    %v370 = vmul.f32 1.0, %v369
    %v371 = vmul.f32 %v340, %v76
    %v372 = vmul.f32 %v342, %v77
    %v373 = vmul.f32 %v344, %v78
    %v374 = vmul.f32 %v346, %v79
    %v375 = vld [vmem:[#allocation8] sm:$0xff]
    %v376 = vld [vmem:[#allocation8 + $0x8] sm:$0xff]
    %v377 = vld [vmem:[#allocation8 + $0x10] sm:$0xff]
    %v378 = vld [vmem:[#allocation8 + $0x18] sm:$0xff]
    %v379 = vld [vmem:[#allocation8 + $0x20] sm:$0xff]
    %v380 = vld [vmem:[#allocation8 + $0x28] sm:$0xff]
    %v381 = vld [vmem:[#allocation8 + $0x30] sm:$0xff]
    %v382 = vld [vmem:[#allocation8 + $0x38] sm:$0xff]
    %v383 = vld [vmem:[#allocation8 + $0x40] sm:$0xff]
    %v384 = vld [vmem:[#allocation8 + $0x48] sm:$0xff]
    %v385 = vld [vmem:[#allocation8 + $0x50] sm:$0xff]
    %v386 = vld [vmem:[#allocation8 + $0x58] sm:$0xff]
    %v387 = vld [vmem:[#allocation8 + $0x60] sm:$0xff]
    %v388 = vld [vmem:[#allocation8 + $0x68] sm:$0xff]
    %v389 = vld [vmem:[#allocation8 + $0x70] sm:$0xff]
    %v390 = vld [vmem:[#allocation8 + $0x78] sm:$0xff]
    %391 = vmatprep.subr.mxu0 0.0
    %392 = vmatpush1.msra.mxu0 %v375
    %393 = vmatprep.subr.mxu0 0.0
    %394 = vmatpush1.msra.mxu0 %v376
    %395 = vmatprep.subr.mxu0 0.0
    %396 = vmatpush1.msra.mxu0 %v377
    %397 = vmatprep.subr.mxu0 0.0
    %398 = vmatpush1.msra.mxu0 %v378
    %399 = vmatprep.subr.mxu0 0.0
    %400 = vmatpush1.msra.mxu0 %v379
    %401 = vmatprep.subr.mxu0 0.0
    %402 = vmatpush1.msra.mxu0 %v380
    %403 = vmatprep.subr.mxu0 0.0
    %404 = vmatpush1.msra.mxu0 %v381
    %405 = vmatprep.subr.mxu0 0.0
    %406 = vmatpush1.msra.mxu0 %v382
    %407 = vmatprep.subr.mxu0 0.0
    %408 = vmatpush1.msra.mxu0 %v383
    %409 = vmatprep.subr.mxu0 0.0
    %410 = vmatpush1.msra.mxu0 %v384
    %411 = vmatprep.subr.mxu0 0.0
    %412 = vmatpush1.msra.mxu0 %v385
    %413 = vmatprep.subr.mxu0 0.0
    %414 = vmatpush1.msra.mxu0 %v386
    %415 = vmatprep.subr.mxu0 0.0
    %416 = vmatpush1.msra.mxu0 %v387
    %417 = vmatprep.subr.mxu0 0.0
    %418 = vmatpush1.msra.mxu0 %v388
    %419 = vmatprep.subr.mxu0 0.0
    %420 = vmatpush1.msra.mxu0 %v389
    %421 = vmatprep.subr.mxu0 0.0
    %422 = vmatpush1.msra.mxu0 %v390
    %423 = vmatprep.subr.mxu0 0.0
    %424 = vmatpush1.msra.mxu0 0.0
    %425 = vmatprep.subr.mxu0 0.0
    %426 = vmatpush1.msra.mxu0 0.0
    %427 = vmatprep.subr.mxu0 0.0
    %428 = vmatpush1.msra.mxu0 0.0
    %429 = vmatprep.subr.mxu0 0.0
    %430 = vmatpush1.msra.mxu0 0.0
    %431 = vmatprep.subr.mxu0 0.0
    %432 = vmatpush1.msra.mxu0 0.0
    %433 = vmatprep.subr.mxu0 0.0
    %434 = vmatpush1.msra.mxu0 0.0
    %435 = vmatprep.subr.mxu0 0.0
    %436 = vmatpush1.msra.mxu0 0.0
    %437 = vmatprep.subr.mxu0 0.0
    %438 = vmatpush1.msra.mxu0 0.0
    %439 = vmatprep.subr.mxu0 0.0
    %440 = vmatpush1.msra.mxu0 0.0
    %441 = vmatprep.subr.mxu0 0.0
    %442 = vmatpush1.msra.mxu0 0.0
    %443 = vmatprep.subr.mxu0 0.0
    %444 = vmatpush1.msra.mxu0 0.0
    %445 = vmatprep.subr.mxu0 0.0
    %446 = vmatpush1.msra.mxu0 0.0
    %447 = vmatprep.subr.mxu0 0.0
    %448 = vmatpush1.msra.mxu0 0.0
    %449 = vmatprep.subr.mxu0 0.0
    %450 = vmatpush1.msra.mxu0 0.0
    %451 = vmatprep.subr.mxu0 0.0
    %452 = vmatpush1.msra.mxu0 0.0
    %453 = vmatprep.subr.mxu0 0.0
    %454 = vmatpush1.msra.mxu0 0.0
    %455 = vmatprep.mubr.f32.mxu0 0.0
    %456 = vmatmul.mubr.f32.gmra.mrb[0].mxu0 %v371
    %v457 = vpop.f32.mrb[0].mxu0
    %v458 = vadd.f32 0.0, %v457
    %v459 = vpop.f32.mrb[0].mxu0
    %460 = vmatprep.mubr.f32.mxu0 0.0
    %461 = vmatmul.mubr.f32.gmra.mrb[0].mxu0 %v372
    %v462 = vpop.f32.mrb[0].mxu0
    %v463 = vadd.f32 0.0, %v462
    %v464 = vpop.f32.mrb[0].mxu0
    %465 = vmatprep.mubr.f32.mxu0 0.0
    %466 = vmatmul.mubr.f32.gmra.mrb[0].mxu0 %v373
    %v467 = vpop.f32.mrb[0].mxu0
    %v468 = vadd.f32 0.0, %v467
    %v469 = vpop.f32.mrb[0].mxu0
    %470 = vmatprep.mubr.f32.mxu0 0.0
    %471 = vmatmul.mubr.f32.gmra.mrb[0].mxu0 %v374
    %v472 = vpop.f32.mrb[0].mxu0
    %v473 = vadd.f32 0.0, %v472
    %v474 = vpop.f32.mrb[0].mxu0
    %475 = vdwg.mxu0
    %v476 = vadd.f32 %v305, %v458
    %v477 = vadd.f32 %v310, %v463
    %v478 = vadd.f32 %v315, %v468
    %v479 = vadd.f32 %v320, %v473
    %v480 = vtanh.pop %v476
    %v481 = vtanh.pop %v477
    %v482 = vtanh.pop %v478
    %v483 = vtanh.pop %v479
    %v484 = vsub.f32 %v480, %v76
    %v485 = vsub.f32 %v481, %v77
    %v486 = vsub.f32 %v482, %v78
    %v487 = vsub.f32 %v483, %v79
    %v488 = vmul.f32 %v364, %v484
    %v489 = vmul.f32 %v366, %v485
    %v490 = vmul.f32 %v368, %v486
    %v491 = vmul.f32 %v370, %v487
    %v492 = vadd.f32 %v76, %v488
    %v493 = vadd.f32 %v77, %v489
    %v494 = vadd.f32 %v78, %v490
    %v495 = vadd.f32 %v79, %v491
    %496 = vst [vmem:[#allocation10] sm:$0xff] %v492
    %497 = vst [vmem:[#allocation10 + $0x8] sm:$0xff] %v493
    %498 = vst [vmem:[#allocation10 + $0x10] sm:$0xff] %v494
    %499 = vst [vmem:[#allocation10 + $0x18] sm:$0xff] %v495
    // Predicated region
    $region38: #{tpu_custom_call.1} parent=1 // pred_check
      _
    $region39: #{tpu_custom_call.1} parent=1 // pred_check_branch
      %501 = sbr.rel (0) target = $region41
    $region40: #{tpu_custom_call.1} parent=1 // pred_region
      %s503 = ssub.s32 512, 512
      %504 = vsyncadd [#allocation4], %s503
      %s505 = sshll.u32 [#allocation10], 4
      %s506 = int_to_ptr.vmem [resolvable:$true] %s505
      %511 = dma.vmem_to_hbm [thread:$0]  %s506, 512, %s5, [#allocation4], 128, 128, 8
    $region41: #{tpu_custom_call.1} parent=1 // pred_fallthru
      _
    // Predicated region
    $region42: #{tpu_custom_call.1} parent=1 // pred_check
      _
    $region43: #{tpu_custom_call.1} parent=1 // pred_check_branch
      %513 = sbr.rel (0) target = $region45
    $region44: #{tpu_custom_call.1} parent=1 // pred_region
      %514 = dma.done [#allocation4], 512
    $region45: #{tpu_custom_call.1} parent=1 // pred_fallthru
      _
    %515 = vsyncpa [#allocation3], 1
    %516 = vsyncpa [#allocation6], 1
    %517 = vsyncpa [#allocation9], 1
    %518 = vsyncpa [#allocation4], 1

</llo_original>
